<compile_context>
chip_gen: v7x
topology: tpu7x:2x2x1
jax: 0.10.0
libtpu: 0.0.40
codegen_flags: <defaults>
</compile_context>

<pallas_src>
import jax
import jax.numpy as jnp
from jax.experimental import pallas as pl
from jax.experimental.pallas import tpu as pltpu


def _ks_kernel(yt_ref, a_ref, c_ref, out_ref):
    # yt_ref:  (M, TN)  objectives for this (batch, N-tile), N on the lane axis
    # a_ref:   (R, M)   1 / (utopia - nadir)           (resident across N tiles)
    # c_ref:   (R, M)   -nadir / (utopia - nadir)      (resident across N tiles)
    # out_ref: (R, TN)  scalarized values, N on the lane axis (lane-dense store)
    yt = yt_ref[...].astype(jnp.float32)   # (M, TN)
    a = a_ref[...]                         # (R, M), already float32
    c = c_ref[...]                         # (R, M)

    m_dim = yt.shape[0]

    def term(m):
        # y[m, :] broadcast over sublanes (R), a[:, m]/c[:, m] broadcast over
        # lanes (TN):  term[k, n] = y[n, m] * a[k, m] + c[k, m]
        return yt[m:m + 1, :] * a[:, m:m + 1] + c[:, m:m + 1]

    # Running min over the (small) objective dimension — statically unrolled.
    acc = term(0)
    for m in range(1, m_dim):
        acc = jnp.minimum(acc, term(m))

    out_ref[...] = acc


def ks_scalarization(Y, utopia_points, nadir_points, *, tn=None):
    """Pallas implementation of KSScalarization.forward.

    Args:
      Y:              (B, N, M) objective vectors.
      utopia_points:  (B, R, M) utopia points.
      nadir_points:   (B, R, M) nadir points.
      tn:             optional N-tile size (must be a multiple of 128 or == N).

    Returns:
      (B, N, R) float32 scalarized objective values.
    """
    B, N, M = Y.shape
    _, R, _ = utopia_points.shape
    assert utopia_points.shape == nadir_points.shape == (B, R, M)

    f32 = jnp.float32
    u = utopia_points.astype(f32)
    nad = nadir_points.astype(f32)
    # Affine reformulation: (y - nadir) * inv_w  ==  y * a + c
    a = 1.0 / (u - nad)          # (B, R, M)
    c = -nad * a                 # (B, R, M)

    # Lane-dense presentation of Y: (B, M, N) so N sits on the 128-lane axis.
    Y_t = jnp.swapaxes(Y, -1, -2)

    # Tile size over N: full dim if small, else a 128-multiple capped at 1024.
    if tn is None:
        tn = N if N <= 1024 else 1024
    if tn != N and tn % 128 != 0:
        raise ValueError("tn must be a multiple of 128 or equal to N")

    grid = (B, pl.cdiv(N, tn))

    out_rn = pl.pallas_call(
        _ks_kernel,
        out_shape=jax.ShapeDtypeStruct((B, R, N), f32),
        grid_spec=pltpu.PrefetchScalarGridSpec(
            num_scalar_prefetch=0,
            grid=grid,
            in_specs=[
                # Y_t tile: (M, tn), indexed on batch and N-tile.
                pl.BlockSpec((None, M, tn), lambda b, n: (b, 0, n)),
                # a, c: resident across the N-tile axis (same block per batch).
                pl.BlockSpec((None, R, M), lambda b, n: (b, 0, 0)),
                pl.BlockSpec((None, R, M), lambda b, n: (b, 0, 0)),
            ],
            out_specs=pl.BlockSpec((None, R, tn), lambda b, n: (b, 0, n)),
        ),
        compiler_params=pltpu.CompilerParams(
            dimension_semantics=("parallel", "parallel"),
        ),
    )(Y_t, a, c)

    # Restore the (B, N, R) contract of the PyTorch module.
    return jnp.swapaxes(out_rn, -1, -2)


def ks_scalarization_ref(Y, utopia_points, nadir_points):
    """Pure-JAX reference mirroring the PyTorch computation exactly."""
    weights = utopia_points - nadir_points                       # (B, R, M)
    inv_w = 1.0 / weights
    diff = Y[:, :, None, :] - nadir_points[:, None, :, :]        # (B, N, R, M)
    weighted = inv_w[:, None, :, :] * diff                       # (B, N, R, M)
    return jnp.min(weighted, axis=-1)                            # (B, N, R)


if __name__ == "__main__":
    key = jax.random.PRNGKey(0)

    configs = [
        # (B, N, M, R, tn)
        (2, 8, 4, 4, None),     # original small shape, single tile
        (2, 256, 16, 8, 128),   # aligned multi-tile over N
        (1, 300, 6, 3, 128),    # uneven N: last tile masked on store
    ]

    for (B, N, M, R, tn) in configs:
        key, k1, k2, k3 = jax.random.split(key, 4)
        Y = jax.random.normal(k1, (B, N, M), dtype=jnp.float32)
        nadir_points = jax.random.normal(k2, (B, R, M), dtype=jnp.float32)
        # make utopia strictly better than nadir so weights are positive
        utopia_points = nadir_points + jnp.abs(
            jax.random.normal(k3, (B, R, M), dtype=jnp.float32)
        ) + 0.5

        out = ks_scalarization(Y, utopia_points, nadir_points, tn=tn)
        out = jax.block_until_ready(out)

        ref = ks_scalarization_ref(Y, utopia_points, nadir_points)
        assert out.shape == (B, N, R), (out.shape, (B, N, R))
        assert jnp.allclose(out, ref, atol=1e-5, rtol=1e-5), (
            f"mismatch vs reference for config {(B, N, M, R, tn)}"
        )

    print("KERNEL_OK")
</pallas_src>

<mosaic_0001>
module attributes {stable_mosaic.version = 11 : i64} {
  func.func @_ks_kernel(%arg0: i32, %arg1: i32, %arg2: memref<1x4x8xf32, #tpu.memory_space<vmem>>, %arg3: memref<1x4x4xf32, #tpu.memory_space<vmem>>, %arg4: memref<1x4x4xf32, #tpu.memory_space<vmem>>, %arg5: memref<1x4x8xf32, #tpu.memory_space<vmem>>) attributes {dimension_semantics = [#tpu.dimension_semantics<parallel>, #tpu.dimension_semantics<parallel>], iteration_bounds = array<i64: 2, 1>, scalar_prefetch = 0 : i64, scratch_operands = 0 : i64, tpu.core_type = #tpu.core_type<tc>, window_params = [{transform_indices = @transform_0, window_bounds = array<i64: 1, 4, 8>}, {transform_indices = @transform_1, window_bounds = array<i64: 1, 4, 4>}, {transform_indices = @transform_2, window_bounds = array<i64: 1, 4, 4>}, {transform_indices = @transform_3, window_bounds = array<i64: 1, 4, 8>}]} {
    %c0 = arith.constant 0 : index
    %c0_0 = arith.constant 0 : index
    %c0_1 = arith.constant 0 : index
    %0 = vector.load %arg2[%c0, %c0_0, %c0_1] : memref<1x4x8xf32, #tpu.memory_space<vmem>>, vector<1x4x8xf32>
    %1 = vector.shape_cast %0 : vector<1x4x8xf32> to vector<4x8xf32>
    %c0_2 = arith.constant 0 : index
    %c0_3 = arith.constant 0 : index
    %c0_4 = arith.constant 0 : index
    %2 = vector.load %arg3[%c0_2, %c0_3, %c0_4] : memref<1x4x4xf32, #tpu.memory_space<vmem>>, vector<1x4x4xf32>
    %3 = vector.shape_cast %2 : vector<1x4x4xf32> to vector<4x4xf32>
    %c0_5 = arith.constant 0 : index
    %c0_6 = arith.constant 0 : index
    %c0_7 = arith.constant 0 : index
    %4 = vector.load %arg4[%c0_5, %c0_6, %c0_7] : memref<1x4x4xf32, #tpu.memory_space<vmem>>, vector<1x4x4xf32>
    %5 = vector.shape_cast %4 : vector<1x4x4xf32> to vector<4x4xf32>
    %6 = vector.extract_strided_slice %1 {offsets = [0, 0], sizes = [1, 8], strides = [1, 1]} : vector<4x8xf32> to vector<1x8xf32>
    %7 = vector.extract_strided_slice %3 {offsets = [0, 0], sizes = [4, 1], strides = [1, 1]} : vector<4x4xf32> to vector<4x1xf32>
    %8 = vector.broadcast %6 : vector<1x8xf32> to vector<4x8xf32>
    %9 = vector.broadcast %7 : vector<4x1xf32> to vector<4x8xf32>
    %10 = arith.mulf %8, %9 : vector<4x8xf32>
    %11 = vector.extract_strided_slice %5 {offsets = [0, 0], sizes = [4, 1], strides = [1, 1]} : vector<4x4xf32> to vector<4x1xf32>
    %12 = vector.broadcast %11 : vector<4x1xf32> to vector<4x8xf32>
    %13 = arith.addf %10, %12 : vector<4x8xf32>
    %14 = vector.extract_strided_slice %1 {offsets = [1, 0], sizes = [1, 8], strides = [1, 1]} : vector<4x8xf32> to vector<1x8xf32>
    %15 = vector.extract_strided_slice %3 {offsets = [0, 1], sizes = [4, 1], strides = [1, 1]} : vector<4x4xf32> to vector<4x1xf32>
    %16 = vector.broadcast %14 : vector<1x8xf32> to vector<4x8xf32>
    %17 = vector.broadcast %15 : vector<4x1xf32> to vector<4x8xf32>
    %18 = arith.mulf %16, %17 : vector<4x8xf32>
    %19 = vector.extract_strided_slice %5 {offsets = [0, 1], sizes = [4, 1], strides = [1, 1]} : vector<4x4xf32> to vector<4x1xf32>
    %20 = vector.broadcast %19 : vector<4x1xf32> to vector<4x8xf32>
    %21 = arith.addf %18, %20 : vector<4x8xf32>
    %22 = arith.minimumf %13, %21 : vector<4x8xf32>
    %23 = vector.extract_strided_slice %1 {offsets = [2, 0], sizes = [1, 8], strides = [1, 1]} : vector<4x8xf32> to vector<1x8xf32>
    %24 = vector.extract_strided_slice %3 {offsets = [0, 2], sizes = [4, 1], strides = [1, 1]} : vector<4x4xf32> to vector<4x1xf32>
    %25 = vector.broadcast %23 : vector<1x8xf32> to vector<4x8xf32>
    %26 = vector.broadcast %24 : vector<4x1xf32> to vector<4x8xf32>
    %27 = arith.mulf %25, %26 : vector<4x8xf32>
    %28 = vector.extract_strided_slice %5 {offsets = [0, 2], sizes = [4, 1], strides = [1, 1]} : vector<4x4xf32> to vector<4x1xf32>
    %29 = vector.broadcast %28 : vector<4x1xf32> to vector<4x8xf32>
    %30 = arith.addf %27, %29 : vector<4x8xf32>
    %31 = arith.minimumf %22, %30 : vector<4x8xf32>
    %32 = vector.extract_strided_slice %1 {offsets = [3, 0], sizes = [1, 8], strides = [1, 1]} : vector<4x8xf32> to vector<1x8xf32>
    %33 = vector.extract_strided_slice %3 {offsets = [0, 3], sizes = [4, 1], strides = [1, 1]} : vector<4x4xf32> to vector<4x1xf32>
    %34 = vector.broadcast %32 : vector<1x8xf32> to vector<4x8xf32>
    %35 = vector.broadcast %33 : vector<4x1xf32> to vector<4x8xf32>
    %36 = arith.mulf %34, %35 : vector<4x8xf32>
    %37 = vector.extract_strided_slice %5 {offsets = [0, 3], sizes = [4, 1], strides = [1, 1]} : vector<4x4xf32> to vector<4x1xf32>
    %38 = vector.broadcast %37 : vector<4x1xf32> to vector<4x8xf32>
    %39 = arith.addf %36, %38 : vector<4x8xf32>
    %40 = arith.minimumf %31, %39 : vector<4x8xf32>
    %c0_8 = arith.constant 0 : index
    %c0_9 = arith.constant 0 : index
    %c0_10 = arith.constant 0 : index
    %41 = vector.load %arg5[%c0_8, %c0_9, %c0_10] : memref<1x4x8xf32, #tpu.memory_space<vmem>>, vector<1x4x8xf32>
    %42 = vector.shape_cast %41 : vector<1x4x8xf32> to vector<4x8xf32>
    %43 = vector.shape_cast %40 : vector<4x8xf32> to vector<1x4x8xf32>
    tpu.vector_store %arg5[%c0_8, %c0_9, %c0_10], %43 {strides = array<i32>} : memref<1x4x8xf32, #tpu.memory_space<vmem>>, vector<1x4x8xf32>,
    return
  }
  func.func @transform_0(%arg0: i32, %arg1: i32) -> (i32, i32, i32) {
    %c0_i32 = arith.constant 0 : i32
    %c0_i32_0 = arith.constant 0 : i32
    return %arg0, %c0_i32, %arg1 : i32, i32, i32
  }
  func.func @transform_1(%arg0: i32, %arg1: i32) -> (i32, i32, i32) {
    %c0_i32 = arith.constant 0 : i32
    %c0_i32_0 = arith.constant 0 : i32
    %c0_i32_1 = arith.constant 0 : i32
    return %arg0, %c0_i32, %c0_i32_0 : i32, i32, i32
  }
  func.func @transform_2(%arg0: i32, %arg1: i32) -> (i32, i32, i32) {
    %c0_i32 = arith.constant 0 : i32
    %c0_i32_0 = arith.constant 0 : i32
    %c0_i32_1 = arith.constant 0 : i32
    return %arg0, %c0_i32, %c0_i32_0 : i32, i32, i32
  }
  func.func @transform_3(%arg0: i32, %arg1: i32) -> (i32, i32, i32) {
    %c0_i32 = arith.constant 0 : i32
    %c0_i32_0 = arith.constant 0 : i32
    return %arg0, %c0_i32, %arg1 : i32, i32, i32
  }
}

</mosaic_0001>

<llo_original>
// kernel: tpu_custom_call.1
$region0: #{tpu_custom_call.1}
  #allocation0 [shape = 'u32[]', space=smem, size = 0x4, offset = 0x4, fixed_abs, tag = 'smem constant byte address 0x4 - core index']
  #allocation1 [shape = 'u32[144,128]{1,0:T(1,128)}', space=vmem, size = 0x12000, scoped, tag = 'internal scratch']
  %s0 = inlined_call_operand.hbm [shape: f32[2,4,8], index: 0, kind: input, shape index: {}]
  %s1 = inlined_call_operand.hbm [shape: f32[2,4,4], index: 1, kind: input, shape index: {}]
  %s2 = inlined_call_operand.hbm [shape: f32[2,4,4], index: 2, kind: input, shape index: {}]
  %s3 = inlined_call_operand.hbm [shape: f32[2,4,8], index: 3, kind: output, shape index: {}]
  %s4 = sld [smem:[#allocation0]]
  $region57: #{tpu_custom_call.1} parent=0
    _
  %s6 = ssub.s32 1, %s4
  %s7 = scalar_select 0, %s6, %s4
  $region1: #{tpu_custom_call.1} parent=0
    #allocation2 [shape = 'u8[4096]{0}', space=vmem, size = 0x1000, scoped, tag = 'input window, operand 0']
    #allocation3 [shape = 's32[2]{0}', space=sflag, size = 0x8, scoped, tag = 'scoped memory for tpu_custom_call.1']
    #allocation4 [shape = 's32[2]{0}', space=sflag, size = 0x8, scoped, tag = 'scoped memory for tpu_custom_call.1']
    #allocation5 [shape = 'u8[4096]{0}', space=vmem, size = 0x1000, scoped, tag = 'input window, operand 1']
    #allocation6 [shape = 's32[2]{0}', space=sflag, size = 0x8, scoped, tag = 'scoped memory for tpu_custom_call.1']
    #allocation7 [shape = 'u8[4096]{0}', space=vmem, size = 0x1000, scoped, tag = 'input window, operand 2']
    #allocation8 [shape = 'u8[4096]{0}', space=vmem, size = 0x1000, scoped, tag = 'output window, operand 0']
    %8 = vsyncpa [#allocation3], 0
    %s9 = scalar_lea.sflag [#allocation3], 1
    %10 = vsyncpa %s9, 0
    %11 = vsyncpa [#allocation6], 0
    %s12 = scalar_lea.sflag [#allocation6], 1
    %13 = vsyncpa %s12, 0
    %14 = vsyncpa [#allocation4], 0
    %s15 = scalar_lea.sflag [#allocation4], 1
    %16 = vsyncpa %s15, 0
    loop: start=0, step=1, limit=4
    $region2: #{tpu_custom_call.1} parent=1 // loop_pre_header
      _
    $region3: #{tpu_custom_call.1} parent=1 // loop_header
      %s18 = sphi 0, %s22
      %p19 = scmp.ge.s32.totalorder %s18, 4
      %s25 = sphi 0, %s37
      %s26 = sphi 0, %s33
      %s27 = sphi 0, %s25
      %s28 = sphi 0, %s26
      %s29 = sphi 0, %s27
      %s30 = sphi 0, %s28
      %s42 = sphi 0, %s44
      %s45 = sphi 0, %s42
      %s46 = sphi 0, %s45
      %s62 = sphi 0, %s46
      %s68 = sphi 0, %s70
      %s71 = sphi 0, %s68
      %s72 = sphi 0, %s71
      %s88 = sphi 0, %s72
      %s94 = sphi 0, %s96
      %s97 = sphi 0, %s94
      %s98 = sphi 0, %s97
      %s114 = sphi 0, %s98
      %s122 = sphi 0, %s124
      %s125 = sphi 0, %s122
      %s126 = sphi 0, %s125
      %s142 = sphi 0, %s126
    $region4: #{tpu_custom_call.1} parent=1 // loop_header_branch
      %21 = sbr.rel (%p19) target = $region8
    $region5: #{tpu_custom_call.1} parent=1 // loop_body
      %s23 = ssub.s32 %s18, 1
      %s24 = ssub.s32 %s18, 2
      %s31 = sadd.s32 1, %s26
      %p32 = scmp.ge.s32.totalorder %s31, 1
      %s33 = scalar_select %p32, 0, %s31
      %s34 = sadd.s32 1, %s25
      %s35 = scalar_select %p32, %s34, %s25
      %p36 = scmp.ge.s32.totalorder %s35, 2
      %s37 = scalar_select %p36, 0, %s35
      %s38 = ssub.s32 %s25, %s37
      %s39 = ssub.s32 %s26, %s33
      %s40 = sor.u32 %s38, %s39
      %p41 = scmp.eq.s32.totalorder %s40, 0
      %s43 = sadd.s32 %s42, 1
      %s44 = scalar_select %p41, %s42, %s43
      %p47 = pneg %p41
      %p48 = scmp.eq.s32.totalorder %s18, 1
      %p49 = por %p47, %p48
      %p50 = scmp.ne.s32.totalorder %s42, %s45
      %p51 = scmp.eq.s32.totalorder %s18, 0
      %p52 = por %p50, %p51
      %p53 = scmp.ne.s32.totalorder %s42, %s45
      %p54 = scmp.eq.s32.totalorder %s23, 1
      %p55 = por %p53, %p54
      %p56 = scmp.ne.s32.totalorder %s45, %s46
      %p57 = scmp.eq.s32.totalorder %s23, 0
      %p58 = por %p56, %p57
      %p59 = scmp.ne.s32.totalorder %s45, %s46
      %p60 = scmp.eq.s32.totalorder %s24, 1
      %p61 = por %p59, %p60
      %p63 = scmp.ne.s32.totalorder %s46, %s62
      %p64 = scmp.eq.s32.totalorder %s24, 0
      %p65 = por %p63, %p64
      %s66 = ssub.s32 %s25, %s37
      %p67 = scmp.eq.s32.totalorder %s66, 0
      %s69 = sadd.s32 %s68, 1
      %s70 = scalar_select %p67, %s68, %s69
      %p73 = pneg %p67
      %p74 = scmp.eq.s32.totalorder %s18, 1
      %p75 = por %p73, %p74
      %p76 = scmp.ne.s32.totalorder %s68, %s71
      %p77 = scmp.eq.s32.totalorder %s18, 0
      %p78 = por %p76, %p77
      %p79 = scmp.ne.s32.totalorder %s68, %s71
      %p80 = scmp.eq.s32.totalorder %s23, 1
      %p81 = por %p79, %p80
      %p82 = scmp.ne.s32.totalorder %s71, %s72
      %p83 = scmp.eq.s32.totalorder %s23, 0
      %p84 = por %p82, %p83
      %p85 = scmp.ne.s32.totalorder %s71, %s72
      %p86 = scmp.eq.s32.totalorder %s24, 1
      %p87 = por %p85, %p86
      %p89 = scmp.ne.s32.totalorder %s72, %s88
      %p90 = scmp.eq.s32.totalorder %s24, 0
      %p91 = por %p89, %p90
      %s92 = ssub.s32 %s25, %s37
      %p93 = scmp.eq.s32.totalorder %s92, 0
      %s95 = sadd.s32 %s94, 1
      %s96 = scalar_select %p93, %s94, %s95
      %p99 = pneg %p93
      %p100 = scmp.eq.s32.totalorder %s18, 1
      %p101 = por %p99, %p100
      %p102 = scmp.ne.s32.totalorder %s94, %s97
      %p103 = scmp.eq.s32.totalorder %s18, 0
      %p104 = por %p102, %p103
      %p105 = scmp.ne.s32.totalorder %s94, %s97
      %p106 = scmp.eq.s32.totalorder %s23, 1
      %p107 = por %p105, %p106
      %p108 = scmp.ne.s32.totalorder %s97, %s98
      %p109 = scmp.eq.s32.totalorder %s23, 0
      %p110 = por %p108, %p109
      %p111 = scmp.ne.s32.totalorder %s97, %s98
      %p112 = scmp.eq.s32.totalorder %s24, 1
      %p113 = por %p111, %p112
      %p115 = scmp.ne.s32.totalorder %s98, %s114
      %p116 = scmp.eq.s32.totalorder %s24, 0
      %p117 = por %p115, %p116
      %s118 = ssub.s32 %s25, %s37
      %s119 = ssub.s32 %s26, %s33
      %s120 = sor.u32 %s118, %s119
      %p121 = scmp.eq.s32.totalorder %s120, 0
      %s123 = sadd.s32 %s122, 1
      %s124 = scalar_select %p121, %s122, %s123
      %p127 = pneg %p121
      %p128 = scmp.eq.s32.totalorder %s18, 1
      %p129 = por %p127, %p128
      %p130 = scmp.ne.s32.totalorder %s122, %s125
      %p131 = scmp.eq.s32.totalorder %s18, 0
      %p132 = por %p130, %p131
      %p133 = scmp.ne.s32.totalorder %s122, %s125
      %p134 = scmp.eq.s32.totalorder %s23, 1
      %p135 = por %p133, %p134
      %p136 = scmp.ne.s32.totalorder %s125, %s126
      %p137 = scmp.eq.s32.totalorder %s23, 0
      %p138 = por %p136, %p137
      %p139 = scmp.ne.s32.totalorder %s125, %s126
      %p140 = scmp.eq.s32.totalorder %s24, 1
      %p141 = por %p139, %p140
      %p143 = scmp.ne.s32.totalorder %s126, %s142
      %p144 = scmp.eq.s32.totalorder %s24, 0
      %p145 = por %p143, %p144
      %p146 = scmp.le.s32.totalorder 1, %s18
      %p147 = scmp.lt.s32.totalorder %s18, 3
      %p148 = pnand %p146, %p147
      %p149 = pneg %p148
      // Predicated region
      $region9: #{tpu_custom_call.1} parent=5 // pred_check
        _
      $region10: #{tpu_custom_call.1} parent=5 // pred_check_branch
        %151 = sbr.rel (%p148) target = $region12
      $region11: #{tpu_custom_call.1} parent=5 // pred_region
        %s152 = ssub.s32 %s18, 1
      $region12: #{tpu_custom_call.1} parent=5 // pred_fallthru
        _
      %p153 = scmp.lt.s32.totalorder %s18, 2
      // Predicated region
      $region13: #{tpu_custom_call.1} parent=5 // pred_check
        %p154 = pneg %p153
      $region14: #{tpu_custom_call.1} parent=5 // pred_check_branch
        %156 = sbr.rel (%p154) target = $region16
      $region15: #{tpu_custom_call.1} parent=5 // pred_region
        // Predicated region
        $region17: #{tpu_custom_call.1} parent=15 // pred_check
          %p157 = pneg %p52
        $region18: #{tpu_custom_call.1} parent=15 // pred_check_branch
          %159 = sbr.rel (%p157) target = $region20
        $region19: #{tpu_custom_call.1} parent=15 // pred_region
          %s160 = sand.u32 %s42, 1
          %s161 = scalar_lea.sflag [#allocation3], %s160
          %s162 = sand.u32 %s42, 1
          %s163 = smul.addr %s162, 4
          %s164 = scalar_lea.vmem [#allocation2], %s163
          %s166 = ssub.s32 64, 64
          %167 = vsyncadd %s161, %s166
          %s168 = sadd.s32 %s26, %s25
          %s169 = smul.addr %s168, 64
          %s170 = scalar_lea.hbm %s0, %s169
          %s172 = sshll.u32 %s164, 4
          %s173 = int_to_ptr.vmem [resolvable:$true] %s172
          %175 = dma.hbm_to_vmem [thread:$0]  %s170, 64, %s173, %s161
        $region20: #{tpu_custom_call.1} parent=15 // pred_fallthru
          _
        // Predicated region
        $region21: #{tpu_custom_call.1} parent=15 // pred_check
          %p176 = pneg %p78
        $region22: #{tpu_custom_call.1} parent=15 // pred_check_branch
          %178 = sbr.rel (%p176) target = $region24
        $region23: #{tpu_custom_call.1} parent=15 // pred_region
          %s179 = sand.u32 %s18, 1
          %s180 = scalar_lea.sflag [#allocation6], %s179
          %s181 = sand.u32 %s68, 1
          %s182 = smul.addr %s181, 4
          %s183 = scalar_lea.vmem [#allocation5], %s182
          %s185 = ssub.s32 64, 64
          %186 = vsyncadd %s180, %s185
          %s187 = smul.addr %s25, 64
          %s188 = scalar_lea.hbm %s1, %s187
          %s190 = sshll.u32 %s183, 4
          %s191 = int_to_ptr.vmem [resolvable:$true] %s190
          %193 = dma.hbm_to_vmem [thread:$0]  %s188, 64, %s191, %s180
        $region24: #{tpu_custom_call.1} parent=15 // pred_fallthru
          _
        // Predicated region
        $region25: #{tpu_custom_call.1} parent=15 // pred_check
          %p194 = pneg %p104
        $region26: #{tpu_custom_call.1} parent=15 // pred_check_branch
          %196 = sbr.rel (%p194) target = $region28
        $region27: #{tpu_custom_call.1} parent=15 // pred_region
          %s197 = sand.u32 %s18, 1
          %s198 = scalar_lea.sflag [#allocation6], %s197
          %s199 = sand.u32 %s94, 1
          %s200 = smul.addr %s199, 4
          %s201 = scalar_lea.vmem [#allocation7], %s200
          %s203 = ssub.s32 64, 64
          %204 = vsyncadd %s198, %s203
          %s205 = smul.addr %s25, 64
          %s206 = scalar_lea.hbm %s2, %s205
          %s208 = sshll.u32 %s201, 4
          %s209 = int_to_ptr.vmem [resolvable:$true] %s208
          %211 = dma.hbm_to_vmem [thread:$0]  %s206, 64, %s209, %s198
        $region28: #{tpu_custom_call.1} parent=15 // pred_fallthru
          _
      $region16: #{tpu_custom_call.1} parent=5 // pred_fallthru
        _
      %p212 = scmp.le.s32.totalorder 1, %s18
      %p213 = scmp.lt.s32.totalorder %s18, 3
      %p214 = pnand %p212, %p213
      %p215 = pneg %p214
      // Predicated region
      $region29: #{tpu_custom_call.1} parent=5 // pred_check
        _
      $region30: #{tpu_custom_call.1} parent=5 // pred_check_branch
        %217 = sbr.rel (%p214) target = $region32
      $region31: #{tpu_custom_call.1} parent=5 // pred_region
        %s218 = ssub.s32 %s18, 1
        %s219 = sand.u32 %s45, 1
        %s220 = scalar_lea.sflag [#allocation3], %s219
        %s221 = sand.u32 %s45, 1
        %s222 = smul.addr %s221, 4
        %s223 = scalar_lea.vmem [#allocation2], %s222
        // Predicated region
        $region33: #{tpu_custom_call.1} parent=31 // pred_check
          %p224 = pneg %p58
        $region34: #{tpu_custom_call.1} parent=31 // pred_check_branch
          %226 = sbr.rel (%p224) target = $region36
        $region35: #{tpu_custom_call.1} parent=31 // pred_region
          %227 = dma.done %s220, 64
        $region36: #{tpu_custom_call.1} parent=31 // pred_fallthru
          _
        %s228 = sand.u32 %s23, 1
        %s229 = scalar_lea.sflag [#allocation6], %s228
        %s230 = sand.u32 %s71, 1
        %s231 = smul.addr %s230, 4
        %s232 = scalar_lea.vmem [#allocation5], %s231
        // Predicated region
        $region37: #{tpu_custom_call.1} parent=31 // pred_check
          %p233 = pneg %p84
        $region38: #{tpu_custom_call.1} parent=31 // pred_check_branch
          %235 = sbr.rel (%p233) target = $region40
        $region39: #{tpu_custom_call.1} parent=31 // pred_region
          %236 = dma.done %s229, 64
        $region40: #{tpu_custom_call.1} parent=31 // pred_fallthru
          _
        %s237 = sand.u32 %s23, 1
        %s238 = scalar_lea.sflag [#allocation6], %s237
        %s239 = sand.u32 %s97, 1
        %s240 = smul.addr %s239, 4
        %s241 = scalar_lea.vmem [#allocation7], %s240
        // Predicated region
        $region41: #{tpu_custom_call.1} parent=31 // pred_check
          %p242 = pneg %p110
        $region42: #{tpu_custom_call.1} parent=31 // pred_check_branch
          %244 = sbr.rel (%p242) target = $region44
        $region43: #{tpu_custom_call.1} parent=31 // pred_region
          %245 = dma.done %s238, 64
        $region44: #{tpu_custom_call.1} parent=31 // pred_fallthru
          _
        %s246 = sand.u32 %s45, 1
        %s247 = scalar_lea.sflag [#allocation3], %s246
        %s248 = sand.u32 %s45, 1
        %s249 = smul.addr %s248, 4
        %s250 = scalar_lea.vmem [#allocation2], %s249
        %p251 = pneg %p58
        %p252 = pneg %p55
        %s253 = sand.u32 %s23, 1
        %s254 = scalar_lea.sflag [#allocation6], %s253
        %s255 = sand.u32 %s71, 1
        %s256 = smul.addr %s255, 4
        %s257 = scalar_lea.vmem [#allocation5], %s256
        %p258 = pneg %p84
        %p259 = pneg %p81
        %s260 = sand.u32 %s23, 1
        %s261 = scalar_lea.sflag [#allocation6], %s260
        %s262 = sand.u32 %s97, 1
        %s263 = smul.addr %s262, 4
        %s264 = scalar_lea.vmem [#allocation7], %s263
        %p265 = pneg %p110
        %p266 = pneg %p107
        %p267 = pneg %p138
        %p268 = pneg %p135
        %s269 = sand.u32 %s125, 1
        %s270 = scalar_lea.sflag [#allocation4], %s269
        %s271 = sand.u32 %s125, 1
        %s272 = smul.addr %s271, 4
        %s273 = scalar_lea.vmem [#allocation8], %s272
        %v274 = vld [vmem:[%s223] sm:$0xf]
        %v275 = vld [vmem:[%s232] sm:$0xf]
        %v276 = vld [vmem:[%s241] sm:$0xf]
        %v277 = vlaneseq
        %v278 = vshrl.u32 %v277, 7
        %v279 = vsub.s32 0, %v278
        %v280 = vrot.slane %v274, %v279
        %282 = vset.pattern.permute.xlu0 0
        %283 = vperm.xlu0 %282, %v275
        %v284 = vpop.permute.xlu0 %283
        %v286 = vmul.f32 %v280, %v284
        %288 = vset.pattern.permute.xlu0 0
        %289 = vperm.xlu0 %288, %v276
        %v290 = vpop.permute.xlu0 %289
        %v292 = vadd.f32 %v286, %v290
        %v293 = vlaneseq
        %v294 = vshrl.u32 %v293, 7
        %v295 = vsub.s32 1, %v294
        %v296 = vrot.slane %v274, %v295
        %297 = vset.pattern.permute.xlu0 1
        %298 = vperm.xlu0 %297, %v275
        %v299 = vpop.permute.xlu0 %298
        %v301 = vmul.f32 %v296, %v299
        %302 = vset.pattern.permute.xlu0 1
        %303 = vperm.xlu0 %302, %v276
        %v304 = vpop.permute.xlu0 %303
        %v306 = vadd.f32 %v301, %v304
        %v307 = vmin.f32 %v292, %v306
        %v308 = vlaneseq
        %v309 = vshrl.u32 %v308, 7
        %v310 = vsub.s32 2, %v309
        %v311 = vrot.slane %v274, %v310
        %312 = vset.pattern.permute.xlu0 2
        %313 = vperm.xlu0 %312, %v275
        %v314 = vpop.permute.xlu0 %313
        %v316 = vmul.f32 %v311, %v314
        %317 = vset.pattern.permute.xlu0 2
        %318 = vperm.xlu0 %317, %v276
        %v319 = vpop.permute.xlu0 %318
        %v321 = vadd.f32 %v316, %v319
        %v322 = vmin.f32 %v307, %v321
        %v323 = vlaneseq
        %v324 = vshrl.u32 %v323, 7
        %v325 = vsub.s32 3, %v324
        %v326 = vrot.slane %v274, %v325
        %327 = vset.pattern.permute.xlu0 3
        %328 = vperm.xlu0 %327, %v275
        %v329 = vpop.permute.xlu0 %328
        %v331 = vmul.f32 %v326, %v329
        %332 = vset.pattern.permute.xlu0 3
        %333 = vperm.xlu0 %332, %v276
        %v334 = vpop.permute.xlu0 %333
        %v336 = vadd.f32 %v331, %v334
        %v337 = vmin.f32 %v322, %v336
        %vm338 = vcmask 60416
        %339 = vst.msk [vmem:[%s273] sm:$0xf] %vm338, %v337
        %s340 = sand.u32 %s125, 1
        %s341 = scalar_lea.sflag [#allocation4], %s340
        %s342 = sand.u32 %s125, 1
        %s343 = smul.addr %s342, 4
        %s344 = scalar_lea.vmem [#allocation8], %s343
        // Predicated region
        $region45: #{tpu_custom_call.1} parent=31 // pred_check
          %p345 = pneg %p135
        $region46: #{tpu_custom_call.1} parent=31 // pred_check_branch
          %347 = sbr.rel (%p345) target = $region48
        $region47: #{tpu_custom_call.1} parent=31 // pred_region
          %s349 = ssub.s32 64, 64
          %350 = vsyncadd %s341, %s349
          %s351 = sadd.s32 %s28, %s27
          %s352 = smul.addr %s351, 64
          %s353 = scalar_lea.hbm %s3, %s352
          %s355 = sshll.u32 %s344, 4
          %s356 = int_to_ptr.vmem [resolvable:$true] %s355
          %358 = dma.vmem_to_hbm [thread:$0]  %s356, 64, %s353, %s341
        $region48: #{tpu_custom_call.1} parent=31 // pred_fallthru
          _
      $region32: #{tpu_custom_call.1} parent=5 // pred_fallthru
        _
      %p359 = scmp.le.s32.totalorder 2, %s18
      // Predicated region
      $region49: #{tpu_custom_call.1} parent=5 // pred_check
        %p360 = pneg %p359
      $region50: #{tpu_custom_call.1} parent=5 // pred_check_branch
        %362 = sbr.rel (%p360) target = $region52
      $region51: #{tpu_custom_call.1} parent=5 // pred_region
        %s363 = ssub.s32 %s18, 2
        // Predicated region
        $region53: #{tpu_custom_call.1} parent=51 // pred_check
          %p364 = pneg %p141
        $region54: #{tpu_custom_call.1} parent=51 // pred_check_branch
          %366 = sbr.rel (%p364) target = $region56
        $region55: #{tpu_custom_call.1} parent=51 // pred_region
          %s367 = sand.u32 %s126, 1
          %s368 = scalar_lea.sflag [#allocation4], %s367
          %s369 = sand.u32 %s126, 1
          %s370 = smul.addr %s369, 4
          %s371 = scalar_lea.vmem [#allocation8], %s370
          %372 = dma.done %s368, 64
        $region56: #{tpu_custom_call.1} parent=51 // pred_fallthru
          _
      $region52: #{tpu_custom_call.1} parent=5 // pred_fallthru
        _
    $region6: #{tpu_custom_call.1} parent=1 // loop_footer
      %s22 = sadd.s32 1, %s18
    $region7: #{tpu_custom_call.1} parent=1 // loop_footer_branch
      %17 = sbr.rel target = $region3
    $region8: #{tpu_custom_call.1} parent=1 // loop_exit
      _
    %373 = vsyncpa [#allocation3], 1
    %s374 = scalar_lea.sflag [#allocation3], 1
    %375 = vsyncpa %s374, 1
    %376 = vsyncpa [#allocation6], 1
    %s377 = scalar_lea.sflag [#allocation6], 1
    %378 = vsyncpa %s377, 1
    %379 = vsyncpa [#allocation4], 1
    %s380 = scalar_lea.sflag [#allocation4], 1
    %381 = vsyncpa %s380, 1

</llo_original>
